<compile_context>
chip_gen: v7x
topology: tpu7x:2x2x1
jax: 0.10.0
libtpu: 0.0.40
codegen_flags: <defaults>
</compile_context>

<pallas_src>
import math
import functools

import jax
import jax.numpy as jnp
from jax.experimental import pallas as pl
from jax.experimental.pallas import tpu as pltpu


def _fc_kernel(x_ref, w_ref, b_ref, o_ref, acc_ref, *, weight_gain):
    """One (tm, tn) output tile, reducing over the K (in_dim) grid axis."""
    k = pl.program_id(2)

    @pl.when(k == 0)
    def _():
        acc_ref[...] = jnp.zeros_like(acc_ref)

    # x[tm, tk] · w[tn, tk] contracted over the last dim of each -> [tm, tn].
    # Native-dtype operands (bf16 stays bf16), f32 accumulation on the MXU.
    acc_ref[...] += jax.lax.dot_general(
        x_ref[...],
        w_ref[...],
        dimension_numbers=(((1,), (1,)), ((), ())),
        preferred_element_type=jnp.float32,
    )

    @pl.when(k == pl.num_programs(2) - 1)
    def _():
        # Gain deferred to the epilogue (tm*tn mults once per tile instead of
        # tn*tk per K step); raw (un-gained) bias matches the addmm path.
        o_ref[...] = (
            acc_ref[...] * weight_gain + b_ref[...].astype(jnp.float32)
        ).astype(o_ref.dtype)


def _pick_tile(dim, target, align):
    """Largest tile <= target that is a multiple of `align` and divides `dim`.

    Falls back to the full dimension (always a legal block shape) when the
    problem is smaller than the target or has no aligned divisor.
    """
    if dim <= target:
        return dim
    t = (target // align) * align
    while t >= align:
        if dim % t == 0:
            return t
        t -= align
    return dim


def fully_connected(x, weight, bias, *, lr_multiplier=1.0, tm=None, tn=None, tk=None):
    """Pallas equivalent of FullyConnected.forward (linear activation, bias)."""
    n, in_dim = x.shape
    out_dim, in_dim_w = weight.shape
    assert in_dim == in_dim_w
    weight_gain = lr_multiplier / math.sqrt(in_dim)

    # MXU/HBM-friendly defaults: 256-aligned M/N tiles, 512-deep K tiles;
    # shrink to the full dim for small problems (block == array dim is legal).
    tm = _pick_tile(n, 256 if tm is None else tm, 128)
    tn = _pick_tile(out_dim, 256 if tn is None else tn, 128)
    tk = _pick_tile(in_dim, 512 if tk is None else tk, 128)
    assert n % tm == 0 and out_dim % tn == 0 and in_dim % tk == 0

    bias2d = bias.reshape(1, out_dim)

    # VMEM budget: double-buffered x/w/out tiles + the f32 accumulator scratch,
    # with 2x headroom, clamped to stay comfortably under v7x's 64 MiB per TC.
    itemsize = jnp.dtype(x.dtype).itemsize
    est = (
        2 * (tm * tk + tn * tk) * itemsize  # double-buffered input tiles
        + 2 * tm * tn * itemsize            # double-buffered output tile
        + tm * tn * 4                       # f32 accumulator
    )
    vmem_limit = int(min(max(2 * est, 32 * 1024 * 1024), 48 * 1024 * 1024))

    kernel = functools.partial(_fc_kernel, weight_gain=weight_gain)

    return pl.pallas_call(
        kernel,
        out_shape=jax.ShapeDtypeStruct((n, out_dim), x.dtype),
        grid_spec=pltpu.PrefetchScalarGridSpec(
            num_scalar_prefetch=0,
            grid=(n // tm, out_dim // tn, in_dim // tk),
            in_specs=[
                pl.BlockSpec((tm, tk), lambda i, j, k: (i, k)),   # x
                pl.BlockSpec((tn, tk), lambda i, j, k: (j, k)),   # weight (torch layout)
                pl.BlockSpec((1, tn), lambda i, j, k: (0, j)),    # bias
            ],
            out_specs=pl.BlockSpec((tm, tn), lambda i, j, k: (i, j)),
            scratch_shapes=[pltpu.VMEM((tm, tn), jnp.float32)],
        ),
        compiler_params=pltpu.CompilerParams(
            dimension_semantics=("parallel", "parallel", "arbitrary"),
            vmem_limit_bytes=vmem_limit,
        ),
    )(x, weight, bias2d)


def _reference(x, weight, bias, lr_multiplier):
    weight_gain = lr_multiplier / math.sqrt(x.shape[1])
    xf = x.astype(jnp.float32)
    wf = weight.astype(jnp.float32)
    return xf @ wf.T * weight_gain + bias.astype(jnp.float32)[None, :]


if __name__ == "__main__":
    key = jax.random.PRNGKey(0)
    kx, kw, kx2, kw2 = jax.random.split(key, 4)

    # --- Test 1: small shapes consistent with the module (single-tile path) ---
    batch, in_dim, out_dim = 8, 32, 32
    lr_multiplier = 1.0
    bias_init = 0.0

    # Deterministic parameter init mirroring __init__:
    #   weight = randn(out_dim, in_dim) / lr_multiplier ; bias = full(out_dim, bias_init)
    weight = jax.random.normal(kw, (out_dim, in_dim), jnp.float32) / lr_multiplier
    bias = jnp.full((out_dim,), bias_init, jnp.float32)
    x = jax.random.normal(kx, (batch, in_dim), jnp.float32)

    out = jax.block_until_ready(fully_connected(x, weight, bias, lr_multiplier=lr_multiplier))
    ref = _reference(x, weight, bias, lr_multiplier)
    assert out.shape == (batch, out_dim)
    assert jnp.allclose(out, ref, atol=1e-5, rtol=1e-5)

    # --- Test 2: larger tiled f32 case (exercises the 3-D grid / K accumulation) ---
    n2, k2, m2 = 512, 1024, 512
    lr2 = 0.01
    w2 = jax.random.normal(kw2, (m2, k2), jnp.float32) / lr2
    b2 = jnp.full((m2,), 0.25, jnp.float32)
    x2 = jax.random.normal(kx2, (n2, k2), jnp.float32)

    out2 = jax.block_until_ready(fully_connected(x2, w2, b2, lr_multiplier=lr2))
    ref2 = _reference(x2, w2, b2, lr2)
    assert out2.shape == (n2, m2)
    assert jnp.allclose(out2, ref2, atol=1e-3, rtol=1e-4)

    # --- Test 3: bf16 operands fed natively to the MXU (f32 accumulation) ---
    x3 = x2.astype(jnp.bfloat16)
    w3 = w2.astype(jnp.bfloat16)
    out3 = jax.block_until_ready(fully_connected(x3, w3, b2, lr_multiplier=lr2))
    ref3 = _reference(x3, w3, b2, lr2)
    assert out3.dtype == jnp.bfloat16
    assert jnp.allclose(out3.astype(jnp.float32), ref3, atol=0.2, rtol=2e-2)

    # TODO(synk): non-'linear' activations go through nvidia_ops.bias_act
    # (fused bias+act+gain+clamp); only the default 'linear' path is implemented.
    print("KERNEL_OK")
</pallas_src>

<mosaic_0001>
module attributes {stable_mosaic.version = 11 : i64} {
  func.func @_fc_kernel(%arg0: i32, %arg1: i32, %arg2: i32, %arg3: memref<8x32xf32, #tpu.memory_space<vmem>>, %arg4: memref<32x32xf32, #tpu.memory_space<vmem>>, %arg5: memref<1x32xf32, #tpu.memory_space<vmem>>, %arg6: memref<8x32xf32, #tpu.memory_space<vmem>>, %arg7: memref<8x32xf32, #tpu.memory_space<vmem>>) attributes {dimension_semantics = [#tpu.dimension_semantics<parallel>, #tpu.dimension_semantics<parallel>, #tpu.dimension_semantics<arbitrary>], iteration_bounds = array<i64: 1, 1, 1>, scalar_prefetch = 0 : i64, scratch_operands = 1 : i64, tpu.core_type = #tpu.core_type<tc>, window_params = [{transform_indices = @transform_0, window_bounds = array<i64: 8, 32>}, {transform_indices = @transform_1, window_bounds = array<i64: 32, 32>}, {transform_indices = @transform_2, window_bounds = array<i64: 1, 32>}, {transform_indices = @transform_3, window_bounds = array<i64: 8, 32>}]} {
    %c0_i32 = arith.constant 0 : i32
    %0 = arith.cmpi eq, %arg2, %c0_i32 : i32
    %1 = arith.extui %0 : i1 to i32
    %c0_i32_0 = arith.constant 0 : i32
    %2 = arith.cmpi ne, %1, %c0_i32_0 : i32
    scf.if %2 {
      %cst_10 = arith.constant 0.000000e+00 : f32
      %12 = vector.broadcast %cst_10 : f32 to vector<8x32xf32>
      %c0_11 = arith.constant 0 : index
      %c0_12 = arith.constant 0 : index
      %13 = vector.load %arg7[%c0_11, %c0_12] : memref<8x32xf32, #tpu.memory_space<vmem>>, vector<8x32xf32>
      tpu.vector_store %arg7[%c0_11, %c0_12], %12 {strides = array<i32>} : memref<8x32xf32, #tpu.memory_space<vmem>>, vector<8x32xf32>,
    } else {
    }
    %c0 = arith.constant 0 : index
    %c0_1 = arith.constant 0 : index
    %3 = vector.load %arg7[%c0, %c0_1] : memref<8x32xf32, #tpu.memory_space<vmem>>, vector<8x32xf32>
    %c0_2 = arith.constant 0 : index
    %c0_3 = arith.constant 0 : index
    %4 = vector.load %arg3[%c0_2, %c0_3] : memref<8x32xf32, #tpu.memory_space<vmem>>, vector<8x32xf32>
    %c0_4 = arith.constant 0 : index
    %c0_5 = arith.constant 0 : index
    %5 = vector.load %arg4[%c0_4, %c0_5] : memref<32x32xf32, #tpu.memory_space<vmem>>, vector<32x32xf32>
    %cst = arith.constant dense<0.000000e+00> : vector<8x32xf32>
    %6 = tpu.matmul %4, %5, %cst {dimension_numbers = #tpu.dot_dimension_numbers<[1], [1], [0], [0], [0, 0, 1, 0], [], []>} : vector<8x32xf32>, vector<32x32xf32>, vector<8x32xf32> -> vector<8x32xf32>
    %7 = arith.addf %3, %6 : vector<8x32xf32>
    %c0_6 = arith.constant 0 : index
    %c0_7 = arith.constant 0 : index
    %8 = vector.load %arg7[%c0_6, %c0_7] : memref<8x32xf32, #tpu.memory_space<vmem>>, vector<8x32xf32>
    tpu.vector_store %arg7[%c0_6, %c0_7], %7 {strides = array<i32>} : memref<8x32xf32, #tpu.memory_space<vmem>>, vector<8x32xf32>,
    %c0_i32_8 = arith.constant 0 : i32
    %9 = arith.cmpi eq, %arg2, %c0_i32_8 : i32
    %10 = arith.extui %9 : i1 to i32
    %c0_i32_9 = arith.constant 0 : i32
    %11 = arith.cmpi ne, %10, %c0_i32_9 : i32
    scf.if %11 {
      %c0_10 = arith.constant 0 : index
      %c0_11 = arith.constant 0 : index
      %12 = vector.load %arg7[%c0_10, %c0_11] : memref<8x32xf32, #tpu.memory_space<vmem>>, vector<8x32xf32>
      %cst_12 = arith.constant 0.176776692 : f32
      %13 = vector.broadcast %cst_12 : f32 to vector<8x32xf32>
      %14 = arith.mulf %12, %13 : vector<8x32xf32>
      %c0_13 = arith.constant 0 : index
      %c0_14 = arith.constant 0 : index
      %15 = vector.load %arg5[%c0_13, %c0_14] : memref<1x32xf32, #tpu.memory_space<vmem>>, vector<1x32xf32>
      %16 = vector.broadcast %15 : vector<1x32xf32> to vector<8x32xf32>
      %17 = arith.addf %14, %16 : vector<8x32xf32>
      %c0_15 = arith.constant 0 : index
      %c0_16 = arith.constant 0 : index
      %18 = vector.load %arg6[%c0_15, %c0_16] : memref<8x32xf32, #tpu.memory_space<vmem>>, vector<8x32xf32>
      tpu.vector_store %arg6[%c0_15, %c0_16], %17 {strides = array<i32>} : memref<8x32xf32, #tpu.memory_space<vmem>>, vector<8x32xf32>,
    } else {
    }
    return
  }
  func.func @transform_0(%arg0: i32, %arg1: i32, %arg2: i32) -> (i32, i32) {
    %c0_i32 = arith.constant 0 : i32
    return %arg0, %arg2 : i32, i32
  }
  func.func @transform_1(%arg0: i32, %arg1: i32, %arg2: i32) -> (i32, i32) {
    %c0_i32 = arith.constant 0 : i32
    return %arg1, %arg2 : i32, i32
  }
  func.func @transform_2(%arg0: i32, %arg1: i32, %arg2: i32) -> (i32, i32) {
    %c0_i32 = arith.constant 0 : i32
    %c0_i32_0 = arith.constant 0 : i32
    return %c0_i32, %arg1 : i32, i32
  }
  func.func @transform_3(%arg0: i32, %arg1: i32, %arg2: i32) -> (i32, i32) {
    %c0_i32 = arith.constant 0 : i32
    return %arg0, %arg1 : i32, i32
  }
}

</mosaic_0001>

<llo_original>
// kernel: tpu_custom_call.1
$region0: #{tpu_custom_call.1}
  #allocation0 [shape = 'u32[]', space=smem, size = 0x4, offset = 0x4, fixed_abs, tag = 'smem constant byte address 0x4 - core index']
  #allocation1 [shape = 'u32[144,128]{1,0:T(1,128)}', space=vmem, size = 0x12000, scoped, tag = 'internal scratch']
  #allocation2 [shape = 'f32[8,32]{1,0:T(8,128)}', space=vmem, size = 0x1000, scoped, tag = 'scratch operand']
  %s0 = inlined_call_operand.hbm [shape: f32[8,32], index: 0, kind: input, shape index: {}]
  %s1 = inlined_call_operand.hbm [shape: f32[32,32], index: 1, kind: input, shape index: {}]
  %s2 = inlined_call_operand.vmem [shape: f32[1,32], index: 2, kind: input, shape index: {}]
  %s3 = inlined_call_operand.hbm [shape: f32[8,32], index: 3, kind: output, shape index: {}]
  %s4 = sld [smem:[#allocation0]]
  $region38: #{tpu_custom_call.1} parent=0
    _
  %s6 = ssub.s32 1, %s4
  %s7 = scalar_select 0, %s6, %s4
  $region1: #{tpu_custom_call.1} parent=0
    #allocation3 [shape = 'u8[4096]{0}', space=vmem, size = 0x1000, scoped, tag = 'input window, operand 0, single buffered']
    #allocation4 [shape = 's32[1]{0}', space=sflag, size = 0x4, scoped, tag = 'scoped memory for tpu_custom_call.1']
    #allocation5 [shape = 's32[1]{0}', space=sflag, size = 0x4, scoped, tag = 'scoped memory for tpu_custom_call.1']
    #allocation6 [shape = 'u8[16384]{0}', space=vmem, size = 0x4000, scoped, tag = 'input window, operand 1, single buffered']
    #allocation7 [shape = 's32[1]{0}', space=sflag, size = 0x4, scoped, tag = 'scoped memory for tpu_custom_call.1']
    #allocation8 [shape = 'u8[4096]{0}', space=vmem, size = 0x1000, scoped, tag = 'output window, operand 0, single buffered']
    %8 = vsyncpa [#allocation4], 0
    %9 = vsyncpa [#allocation7], 0
    %10 = vsyncpa [#allocation5], 0
    // Predicated region
    $region2: #{tpu_custom_call.1} parent=1 // pred_check
      _
    $region3: #{tpu_custom_call.1} parent=1 // pred_check_branch
      %12 = sbr.rel (0) target = $region5
    $region4: #{tpu_custom_call.1} parent=1 // pred_region
      %s14 = ssub.s32 128, 128
      %15 = vsyncadd [#allocation4], %s14
      %s17 = sshll.u32 [#allocation3], 4
      %s18 = int_to_ptr.vmem [resolvable:$true] %s17
      %20 = dma.hbm_to_vmem [thread:$0]  %s0, 128, %s18, [#allocation4]
    $region5: #{tpu_custom_call.1} parent=1 // pred_fallthru
      _
    // Predicated region
    $region6: #{tpu_custom_call.1} parent=1 // pred_check
      _
    $region7: #{tpu_custom_call.1} parent=1 // pred_check_branch
      %22 = sbr.rel (0) target = $region9
    $region8: #{tpu_custom_call.1} parent=1 // pred_region
      %s24 = ssub.s32 512, 512
      %25 = vsyncadd [#allocation7], %s24
      %s26 = sshll.u32 [#allocation6], 4
      %s27 = int_to_ptr.vmem [resolvable:$true] %s26
      %32 = dma.hbm_to_vmem [thread:$0]  %s1, 512, %s27, [#allocation7], 128, 128, 8
    $region9: #{tpu_custom_call.1} parent=1 // pred_fallthru
      _
    // Predicated region
    $region10: #{tpu_custom_call.1} parent=1 // pred_check
      _
    $region11: #{tpu_custom_call.1} parent=1 // pred_check_branch
      %34 = sbr.rel (0) target = $region13
    $region12: #{tpu_custom_call.1} parent=1 // pred_region
      _
    $region13: #{tpu_custom_call.1} parent=1 // pred_fallthru
      _
    // Predicated region
    $region14: #{tpu_custom_call.1} parent=1 // pred_check
      _
    $region15: #{tpu_custom_call.1} parent=1 // pred_check_branch
      %36 = sbr.rel (0) target = $region17
    $region16: #{tpu_custom_call.1} parent=1 // pred_region
      %37 = dma.done [#allocation4], 128
    $region17: #{tpu_custom_call.1} parent=1 // pred_fallthru
      _
    // Predicated region
    $region18: #{tpu_custom_call.1} parent=1 // pred_check
      _
    $region19: #{tpu_custom_call.1} parent=1 // pred_check_branch
      %39 = sbr.rel (0) target = $region21
    $region20: #{tpu_custom_call.1} parent=1 // pred_region
      %40 = dma.done [#allocation7], 512
    $region21: #{tpu_custom_call.1} parent=1 // pred_fallthru
      _
    %p41 = scmp.eq.s32.totalorder 0, 0
    // Predicated region
    $region22: #{tpu_custom_call.1} parent=1 // pred_check
      %p42 = pneg %p41
    $region23: #{tpu_custom_call.1} parent=1 // pred_check_branch
      %44 = sbr.rel (%p42) target = $region25
    $region24: #{tpu_custom_call.1} parent=1 // pred_region
      %vm45 = vcmask 261120
      %46 = vst.msk [vmem:[#allocation2] sm:$0xff] %vm45, 0.0
    $region25: #{tpu_custom_call.1} parent=1 // pred_fallthru
      _
    %v47 = vld [vmem:[#allocation2] sm:$0xff]
    %v48 = vld [vmem:[#allocation3] sm:$0xff]
    %v49 = vld [vmem:[#allocation6] sm:$0xff]
    %v50 = vld [vmem:[#allocation6 + $0x8] sm:$0xff]
    %v51 = vld [vmem:[#allocation6 + $0x10] sm:$0xff]
    %v52 = vld [vmem:[#allocation6 + $0x18] sm:$0xff]
    %vm53 = vcmask 261120
    %v55 = vsel %vm53, %v48, 0
    %v58 = vsel %vm53, %v49, 0
    %v61 = vsel %vm53, %v50, 0
    %v64 = vsel %vm53, %v51, 0
    %v67 = vsel %vm53, %v52, 0
    %69 = vmatprep.subr.mxu0 0.0
    %70 = vmatpush1.xpose.msra.mxu0 %v58
    %71 = vmatprep.subr.mxu0 0.0
    %72 = vmatpush1.xpose.msra.mxu0 %v61
    %73 = vmatprep.subr.mxu0 0.0
    %74 = vmatpush1.xpose.msra.mxu0 %v64
    %75 = vmatprep.subr.mxu0 0.0
    %76 = vmatpush1.xpose.msra.mxu0 %v67
    %77 = vmatprep.subr.mxu0 0.0
    %78 = vmatpush1.xpose.msra.mxu0 0.0
    %79 = vmatprep.subr.mxu0 0.0
    %80 = vmatpush1.xpose.msra.mxu0 0.0
    %81 = vmatprep.subr.mxu0 0.0
    %82 = vmatpush1.xpose.msra.mxu0 0.0
    %83 = vmatprep.subr.mxu0 0.0
    %84 = vmatpush1.xpose.msra.mxu0 0.0
    %85 = vmatprep.subr.mxu0 0.0
    %86 = vmatpush1.xpose.msra.mxu0 0.0
    %87 = vmatprep.subr.mxu0 0.0
    %88 = vmatpush1.xpose.msra.mxu0 0.0
    %89 = vmatprep.subr.mxu0 0.0
    %90 = vmatpush1.xpose.msra.mxu0 0.0
    %91 = vmatprep.subr.mxu0 0.0
    %92 = vmatpush1.xpose.msra.mxu0 0.0
    %93 = vmatprep.subr.mxu0 0.0
    %94 = vmatpush1.xpose.msra.mxu0 0.0
    %95 = vmatprep.subr.mxu0 0.0
    %96 = vmatpush1.xpose.msra.mxu0 0.0
    %97 = vmatprep.subr.mxu0 0.0
    %98 = vmatpush1.xpose.msra.mxu0 0.0
    %99 = vmatprep.subr.mxu0 0.0
    %100 = vmatpush1.xpose.msra.mxu0 0.0
    %101 = vmatprep.subr.mxu0 0.0
    %102 = vmatpush1.xpose.msra.mxu0 0.0
    %103 = vmatprep.subr.mxu0 0.0
    %104 = vmatpush1.xpose.msra.mxu0 0.0
    %105 = vmatprep.subr.mxu0 0.0
    %106 = vmatpush1.xpose.msra.mxu0 0.0
    %107 = vmatprep.subr.mxu0 0.0
    %108 = vmatpush1.xpose.msra.mxu0 0.0
    %109 = vmatprep.subr.mxu0 0.0
    %110 = vmatpush1.xpose.msra.mxu0 0.0
    %111 = vmatprep.subr.mxu0 0.0
    %112 = vmatpush1.xpose.msra.mxu0 0.0
    %113 = vmatprep.subr.mxu0 0.0
    %114 = vmatpush1.xpose.msra.mxu0 0.0
    %115 = vmatprep.subr.mxu0 0.0
    %116 = vmatpush1.xpose.msra.mxu0 0.0
    %117 = vmatprep.subr.mxu0 0.0
    %118 = vmatpush1.xpose.msra.mxu0 0.0
    %119 = vmatprep.subr.mxu0 0.0
    %120 = vmatpush1.xpose.msra.mxu0 0.0
    %121 = vmatprep.subr.mxu0 0.0
    %122 = vmatpush1.xpose.msra.mxu0 0.0
    %123 = vmatprep.subr.mxu0 0.0
    %124 = vmatpush1.xpose.msra.mxu0 0.0
    %125 = vmatprep.subr.mxu0 0.0
    %126 = vmatpush1.xpose.msra.mxu0 0.0
    %127 = vmatprep.subr.mxu0 0.0
    %128 = vmatpush1.xpose.msra.mxu0 0.0
    %129 = vmatprep.subr.mxu0 0.0
    %130 = vmatpush1.xpose.msra.mxu0 0.0
    %131 = vmatprep.subr.mxu0 0.0
    %132 = vmatpush1.xpose.msra.mxu0 0.0
    %133 = vmatprep.mubr.f32.mxu0 0.0
    %134 = vmatmul.mubr.f32.gmra.mrb[0].mxu0 %v55
    %v135 = vpop.f32.mrb[0].mxu0
    %v136 = vadd.f32 0.0, %v135
    %v137 = vpop.f32.mrb[0].mxu0
    %138 = vdwg.mxu0
    %v139 = vadd.f32 %v47, %v136
    %140 = vst.msk [vmem:[#allocation2] sm:$0xff] %vm53, %v139
    // Predicated region
    $region26: #{tpu_custom_call.1} parent=1 // pred_check
      %p141 = pneg %p41
    $region27: #{tpu_custom_call.1} parent=1 // pred_check_branch
      %143 = sbr.rel (%p141) target = $region29
    $region28: #{tpu_custom_call.1} parent=1 // pred_region
      %v144 = vld [vmem:[#allocation2] sm:$0xff]
      %v145 = vmul.f32 %v144, 0.17677669
      %v146 = vld [vmem:[%s2] sm:$0x1]
      %v148 = vlaneseq
      %v149 = vshrl.u32 %v148, 7
      %v150 = vsub.s32 0, %v149
      %v151 = vrot.slane %v146, %v150
      %v153 = vadd.f32 %v145, %v151
      %154 = vst.msk [vmem:[#allocation8] sm:$0xff] %vm53, %v153
    $region29: #{tpu_custom_call.1} parent=1 // pred_fallthru
      _
    // Predicated region
    $region30: #{tpu_custom_call.1} parent=1 // pred_check
      _
    $region31: #{tpu_custom_call.1} parent=1 // pred_check_branch
      %156 = sbr.rel (0) target = $region33
    $region32: #{tpu_custom_call.1} parent=1 // pred_region
      %s158 = ssub.s32 128, 128
      %159 = vsyncadd [#allocation5], %s158
      %s161 = sshll.u32 [#allocation8], 4
      %s162 = int_to_ptr.vmem [resolvable:$true] %s161
      %164 = dma.vmem_to_hbm [thread:$0]  %s162, 128, %s3, [#allocation5]
    $region33: #{tpu_custom_call.1} parent=1 // pred_fallthru
      _
    // Predicated region
    $region34: #{tpu_custom_call.1} parent=1 // pred_check
      _
    $region35: #{tpu_custom_call.1} parent=1 // pred_check_branch
      %166 = sbr.rel (0) target = $region37
    $region36: #{tpu_custom_call.1} parent=1 // pred_region
      %167 = dma.done [#allocation5], 128
    $region37: #{tpu_custom_call.1} parent=1 // pred_fallthru
      _
    %168 = vsyncpa [#allocation4], 1
    %169 = vsyncpa [#allocation7], 1
    %170 = vsyncpa [#allocation5], 1

</llo_original>
